<compile_context>
chip_gen: v7x
topology: tpu7x:2x2x1
jax: 0.10.0
libtpu: 0.0.40
codegen_flags: <defaults>
</compile_context>

<pallas_src>
import jax
import jax.numpy as jnp
from jax.experimental import pallas as pl
from jax.experimental.pallas import tpu as pltpu

LANE = 128
HIDDEN = 256


def _round_up(n, m):
    return ((n + m - 1) // m) * m


def actor_kernel(x_ref, w1_ref, w2_ref, wmu_ref, b12_ref, mu_pack_ref, out_ref):
    # Packed small operands (static slices -> zero-cost views).
    b1 = b12_ref[0:1, :]
    b2 = b12_ref[1:2, :]
    b_mu = mu_pack_ref[0:1, :]
    scale = mu_pack_ref[1:2, :]
    bias = mu_pack_ref[2:3, :]

    # fc1 + relu   (bf16 MXU inputs, f32 accumulation, f32 epilogue)
    h1 = jnp.dot(x_ref[...], w1_ref[...], preferred_element_type=jnp.float32)
    h1 = jnp.maximum(h1 + b1, 0.0)
    # fc2 + relu
    h2 = jnp.dot(h1.astype(jnp.bfloat16), w2_ref[...],
                 preferred_element_type=jnp.float32)
    h2 = jnp.maximum(h2 + b2, 0.0)
    # fc_mu + tanh
    mu = jnp.dot(h2.astype(jnp.bfloat16), wmu_ref[...],
                 preferred_element_type=jnp.float32)
    mu = jnp.tanh(mu + b_mu)
    # rescale to the action range
    out_ref[...] = mu * scale + bias


def actor_forward(x, packed):
    """x: [B, obs_dim] float32. packed: output of pack_params(). Returns [B, act_dim] f32."""
    B, obs_dim = x.shape
    act_dim = packed["act_dim"]
    w1, w2, wmu = packed["w1"], packed["w2"], packed["w_mu"]
    b12, mu_pack = packed["b12"], packed["mu_pack"]
    hidden = w1.shape[1]
    act_pad = wmu.shape[1]

    # Batch tile: fill the 256-wide MXU M-dimension once the batch is large
    # enough; otherwise a single tile rounded up to the bf16 sublane tile (16).
    if B >= 256:
        tb = 256
    else:
        tb = _round_up(max(B, 1), 16)
    b_pad = _round_up(B, tb)
    grid = (b_pad // tb,)

    x_p = jnp.pad(x.astype(jnp.bfloat16), ((0, b_pad - B), (0, 0)))
    operands = (x_p, w1, w2, wmu, b12, mu_pack)

    in_specs = [
        pl.BlockSpec((tb, obs_dim), lambda i: (i, 0)),   # x: tiled over batch
        pl.BlockSpec(w1.shape, lambda i: (0, 0)),        # weights: VMEM-resident
        pl.BlockSpec(w2.shape, lambda i: (0, 0)),
        pl.BlockSpec(wmu.shape, lambda i: (0, 0)),
        pl.BlockSpec(b12.shape, lambda i: (0, 0)),
        pl.BlockSpec(mu_pack.shape, lambda i: (0, 0)),
    ]
    out_spec = pl.BlockSpec((tb, act_pad), lambda i: (i, 0))

    flops = 2 * b_pad * (obs_dim * hidden + hidden * hidden + hidden * act_pad)
    bytes_accessed = sum(int(op.size) * op.dtype.itemsize for op in operands) \
        + b_pad * act_pad * 4
    cost = pl.CostEstimate(flops=flops,
                           transcendentals=b_pad * act_pad,
                           bytes_accessed=bytes_accessed)

    out_padded = pl.pallas_call(
        actor_kernel,
        out_shape=jax.ShapeDtypeStruct((b_pad, act_pad), jnp.float32),
        grid=grid,
        in_specs=in_specs,
        out_specs=out_spec,
        compiler_params=pltpu.CompilerParams(
            dimension_semantics=("parallel",)),
        cost_estimate=cost,
    )(*operands)

    return out_padded[:B, :act_dim]


def init_params(key, obs_dim, act_dim, hidden=HIDDEN,
                action_low=-2.0, action_high=2.0):
    """f32 'logical' params, PyTorch nn.Linear-like init (uniform +-1/sqrt(fan_in)).
    Weights stored [in_features, out_features] (transposed vs torch's [out, in])."""
    ks = jax.random.split(key, 6)

    def linear(kw, kb, fan_in, fan_out):
        bound = 1.0 / jnp.sqrt(jnp.float32(fan_in))
        w = jax.random.uniform(kw, (fan_in, fan_out), jnp.float32, -bound, bound)
        b = jax.random.uniform(kb, (1, fan_out), jnp.float32, -bound, bound)
        return w, b

    w1, b1 = linear(ks[0], ks[1], obs_dim, hidden)
    w2, b2 = linear(ks[2], ks[3], hidden, hidden)
    w_mu, b_mu = linear(ks[4], ks[5], hidden, act_dim)

    action_scale = jnp.full((1, act_dim), (action_high - action_low) / 2.0, jnp.float32)
    action_bias = jnp.full((1, act_dim), (action_high + action_low) / 2.0, jnp.float32)
    return {"w1": w1, "b1": b1, "w2": w2, "b2": b2,
            "w_mu": w_mu, "b_mu": b_mu,
            "action_scale": action_scale, "action_bias": action_bias}


def pack_params(p):
    """Kernel-friendly packing: bf16 weights, act_dim padded to 128 lanes,
    small per-feature vectors concatenated to cut DMA descriptor count."""
    act_dim = p["w_mu"].shape[1]
    act_pad = _round_up(act_dim, LANE)
    pad = act_pad - act_dim

    w1 = p["w1"].astype(jnp.bfloat16)
    w2 = p["w2"].astype(jnp.bfloat16)
    w_mu = jnp.pad(p["w_mu"], ((0, 0), (0, pad))).astype(jnp.bfloat16)

    b12 = jnp.concatenate([p["b1"], p["b2"]], axis=0)                 # [2, H]   f32
    mu_pack = jnp.concatenate(
        [jnp.pad(p["b_mu"], ((0, 0), (0, pad))),
         jnp.pad(p["action_scale"], ((0, 0), (0, pad))),
         jnp.pad(p["action_bias"], ((0, 0), (0, pad)))], axis=0)      # [3, PAD] f32

    return {"w1": w1, "w2": w2, "w_mu": w_mu,
            "b12": b12, "mu_pack": mu_pack, "act_dim": act_dim}


def reference_forward(x, p):
    """Pure-JAX reference with the same bf16-weight / f32-accumulate recipe."""
    bf = jnp.bfloat16
    h1 = jnp.maximum(jnp.dot(x.astype(bf), p["w1"].astype(bf),
                             preferred_element_type=jnp.float32) + p["b1"], 0.0)
    h2 = jnp.maximum(jnp.dot(h1.astype(bf), p["w2"].astype(bf),
                             preferred_element_type=jnp.float32) + p["b2"], 0.0)
    mu = jnp.tanh(jnp.dot(h2.astype(bf), p["w_mu"].astype(bf),
                          preferred_element_type=jnp.float32) + p["b_mu"])
    return mu * p["action_scale"] + p["action_bias"]


if __name__ == "__main__":
    key = jax.random.PRNGKey(0)
    k_param, k_x1, k_x2 = jax.random.split(key, 3)

    obs_dim, act_dim = 8, 4
    params = init_params(k_param, obs_dim, act_dim)
    packed = pack_params(params)

    # Small batch (B=2): single padded tile, grid=(1,).
    x_small = jax.random.normal(k_x1, (2, obs_dim), jnp.float32)
    out_small = actor_forward(x_small, packed)
    jax.block_until_ready(out_small)
    ref_small = reference_forward(x_small, params)
    assert out_small.shape == (2, act_dim)
    assert jnp.allclose(out_small, ref_small, atol=5e-3, rtol=5e-3), \
        float(jnp.max(jnp.abs(out_small - ref_small)))

    # Larger batch (B=512): exercises the batch-tiled parallel grid (2 tiles of 256).
    x_big = jax.random.normal(k_x2, (512, obs_dim), jnp.float32)
    out_big = actor_forward(x_big, packed)
    jax.block_until_ready(out_big)
    ref_big = reference_forward(x_big, params)
    assert out_big.shape == (512, act_dim)
    assert jnp.allclose(out_big, ref_big, atol=5e-3, rtol=5e-3), \
        float(jnp.max(jnp.abs(out_big - ref_big)))

    # Sanity vs. full-f32 math (loose: bf16 weight quantization error only).
    h1 = jnp.maximum(x_small @ params["w1"] + params["b1"], 0.0)
    h2 = jnp.maximum(h1 @ params["w2"] + params["b2"], 0.0)
    mu = jnp.tanh(h2 @ params["w_mu"] + params["b_mu"])
    ref_f32 = mu * params["action_scale"] + params["action_bias"]
    assert jnp.allclose(out_small, ref_f32, atol=5e-2, rtol=5e-2)

    print("KERNEL_OK")
</pallas_src>

<mosaic_0001>
module attributes {stable_mosaic.version = 11 : i64} {
  func.func @actor_kernel(%arg0: i32, %arg1: memref<16x8xbf16, #tpu.memory_space<vmem>>, %arg2: memref<8x256xbf16, #tpu.memory_space<vmem>>, %arg3: memref<256x256xbf16, #tpu.memory_space<vmem>>, %arg4: memref<256x128xbf16, #tpu.memory_space<vmem>>, %arg5: memref<2x256xf32, #tpu.memory_space<vmem>>, %arg6: memref<3x128xf32, #tpu.memory_space<vmem>>, %arg7: memref<16x128xf32, #tpu.memory_space<vmem>>) attributes {dimension_semantics = [#tpu.dimension_semantics<parallel>], iteration_bounds = array<i64: 1>, scalar_prefetch = 0 : i64, scratch_operands = 0 : i64, tpu.core_type = #tpu.core_type<tc>, window_params = [{transform_indices = @transform_0, window_bounds = array<i64: 16, 8>}, {pipeline_mode = #tpu.pipeline_mode<synchronous>, transform_indices = @transform_1, window_bounds = array<i64: 8, 256>}, {pipeline_mode = #tpu.pipeline_mode<synchronous>, transform_indices = @transform_2, window_bounds = array<i64: 256, 256>}, {pipeline_mode = #tpu.pipeline_mode<synchronous>, transform_indices = @transform_3, window_bounds = array<i64: 256, 128>}, {pipeline_mode = #tpu.pipeline_mode<synchronous>, transform_indices = @transform_4, window_bounds = array<i64: 2, 256>}, {pipeline_mode = #tpu.pipeline_mode<synchronous>, transform_indices = @transform_5, window_bounds = array<i64: 3, 128>}, {transform_indices = @transform_6, window_bounds = array<i64: 16, 128>}]} {
    %c0 = arith.constant 0 : index
    %c0_0 = arith.constant 0 : index
    %0 = vector.load %arg5[%c0, %c0_0] : memref<2x256xf32, #tpu.memory_space<vmem>>, vector<1x256xf32>
    %c1 = arith.constant 1 : index
    %c0_1 = arith.constant 0 : index
    %1 = vector.load %arg5[%c1, %c0_1] : memref<2x256xf32, #tpu.memory_space<vmem>>, vector<1x256xf32>
    %c0_2 = arith.constant 0 : index
    %c0_3 = arith.constant 0 : index
    %2 = vector.load %arg6[%c0_2, %c0_3] : memref<3x128xf32, #tpu.memory_space<vmem>>, vector<1x128xf32>
    %c1_4 = arith.constant 1 : index
    %c0_5 = arith.constant 0 : index
    %3 = vector.load %arg6[%c1_4, %c0_5] : memref<3x128xf32, #tpu.memory_space<vmem>>, vector<1x128xf32>
    %c2 = arith.constant 2 : index
    %c0_6 = arith.constant 0 : index
    %4 = vector.load %arg6[%c2, %c0_6] : memref<3x128xf32, #tpu.memory_space<vmem>>, vector<1x128xf32>
    %c0_7 = arith.constant 0 : index
    %c0_8 = arith.constant 0 : index
    %5 = vector.load %arg1[%c0_7, %c0_8] : memref<16x8xbf16, #tpu.memory_space<vmem>>, vector<16x8xbf16>
    %c0_9 = arith.constant 0 : index
    %c0_10 = arith.constant 0 : index
    %6 = vector.load %arg2[%c0_9, %c0_10] : memref<8x256xbf16, #tpu.memory_space<vmem>>, vector<8x256xbf16>
    %cst = arith.constant dense<0.000000e+00> : vector<16x256xf32>
    %7 = tpu.matmul %5, %6, %cst {dimension_numbers = #tpu.dot_dimension_numbers<[1], [0], [0], [1], [0, 0, 1, 1], [], []>} : vector<16x8xbf16>, vector<8x256xbf16>, vector<16x256xf32> -> vector<16x256xf32>
    %8 = vector.broadcast %0 : vector<1x256xf32> to vector<16x256xf32>
    %9 = arith.addf %7, %8 : vector<16x256xf32>
    %cst_11 = arith.constant 0.000000e+00 : f32
    %10 = vector.broadcast %cst_11 : f32 to vector<16x256xf32>
    %11 = arith.maximumf %9, %10 : vector<16x256xf32>
    %12 = arith.truncf %11 : vector<16x256xf32> to vector<16x256xbf16>
    %c0_12 = arith.constant 0 : index
    %c0_13 = arith.constant 0 : index
    %13 = vector.load %arg3[%c0_12, %c0_13] : memref<256x256xbf16, #tpu.memory_space<vmem>>, vector<256x256xbf16>
    %cst_14 = arith.constant dense<0.000000e+00> : vector<16x256xf32>
    %14 = tpu.matmul %12, %13, %cst_14 {dimension_numbers = #tpu.dot_dimension_numbers<[1], [0], [0], [1], [0, 0, 1, 1], [], []>} : vector<16x256xbf16>, vector<256x256xbf16>, vector<16x256xf32> -> vector<16x256xf32>
    %15 = vector.broadcast %1 : vector<1x256xf32> to vector<16x256xf32>
    %16 = arith.addf %14, %15 : vector<16x256xf32>
    %cst_15 = arith.constant 0.000000e+00 : f32
    %17 = vector.broadcast %cst_15 : f32 to vector<16x256xf32>
    %18 = arith.maximumf %16, %17 : vector<16x256xf32>
    %19 = arith.truncf %18 : vector<16x256xf32> to vector<16x256xbf16>
    %c0_16 = arith.constant 0 : index
    %c0_17 = arith.constant 0 : index
    %20 = vector.load %arg4[%c0_16, %c0_17] : memref<256x128xbf16, #tpu.memory_space<vmem>>, vector<256x128xbf16>
    %cst_18 = arith.constant dense<0.000000e+00> : vector<16x128xf32>
    %21 = tpu.matmul %19, %20, %cst_18 {dimension_numbers = #tpu.dot_dimension_numbers<[1], [0], [0], [1], [0, 0, 1, 1], [], []>} : vector<16x256xbf16>, vector<256x128xbf16>, vector<16x128xf32> -> vector<16x128xf32>
    %22 = vector.broadcast %2 : vector<1x128xf32> to vector<16x128xf32>
    %23 = arith.addf %21, %22 : vector<16x128xf32>
    %24 = math.tanh %23 : vector<16x128xf32>
    %25 = vector.broadcast %3 : vector<1x128xf32> to vector<16x128xf32>
    %26 = arith.mulf %24, %25 : vector<16x128xf32>
    %27 = vector.broadcast %4 : vector<1x128xf32> to vector<16x128xf32>
    %28 = arith.addf %26, %27 : vector<16x128xf32>
    %c0_19 = arith.constant 0 : index
    %c0_20 = arith.constant 0 : index
    %29 = vector.load %arg7[%c0_19, %c0_20] : memref<16x128xf32, #tpu.memory_space<vmem>>, vector<16x128xf32>
    tpu.vector_store %arg7[%c0_19, %c0_20], %28 {strides = array<i32>} : memref<16x128xf32, #tpu.memory_space<vmem>>, vector<16x128xf32>,
    return
  }
  func.func @transform_0(%arg0: i32) -> (i32, i32) {
    %c0_i32 = arith.constant 0 : i32
    %c0_i32_0 = arith.constant 0 : i32
    return %arg0, %c0_i32 : i32, i32
  }
  func.func @transform_1(%arg0: i32) -> (i32, i32) {
    %c0_i32 = arith.constant 0 : i32
    %c0_i32_0 = arith.constant 0 : i32
    %c0_i32_1 = arith.constant 0 : i32
    return %c0_i32, %c0_i32_0 : i32, i32
  }
  func.func @transform_2(%arg0: i32) -> (i32, i32) {
    %c0_i32 = arith.constant 0 : i32
    %c0_i32_0 = arith.constant 0 : i32
    %c0_i32_1 = arith.constant 0 : i32
    return %c0_i32, %c0_i32_0 : i32, i32
  }
  func.func @transform_3(%arg0: i32) -> (i32, i32) {
    %c0_i32 = arith.constant 0 : i32
    %c0_i32_0 = arith.constant 0 : i32
    %c0_i32_1 = arith.constant 0 : i32
    return %c0_i32, %c0_i32_0 : i32, i32
  }
  func.func @transform_4(%arg0: i32) -> (i32, i32) {
    %c0_i32 = arith.constant 0 : i32
    %c0_i32_0 = arith.constant 0 : i32
    %c0_i32_1 = arith.constant 0 : i32
    return %c0_i32, %c0_i32_0 : i32, i32
  }
  func.func @transform_5(%arg0: i32) -> (i32, i32) {
    %c0_i32 = arith.constant 0 : i32
    %c0_i32_0 = arith.constant 0 : i32
    %c0_i32_1 = arith.constant 0 : i32
    return %c0_i32, %c0_i32_0 : i32, i32
  }
  func.func @transform_6(%arg0: i32) -> (i32, i32) {
    %c0_i32 = arith.constant 0 : i32
    %c0_i32_0 = arith.constant 0 : i32
    return %arg0, %c0_i32 : i32, i32
  }
}

</mosaic_0001>

<llo_original>
// kernel: tpu_custom_call.1
$region0: #{tpu_custom_call.1}
  #allocation0 [shape = 'u32[]', space=smem, size = 0x4, offset = 0x4, fixed_abs, tag = 'smem constant byte address 0x4 - core index']
  #allocation1 [shape = 'u32[144,128]{1,0:T(1,128)}', space=vmem, size = 0x12000, scoped, tag = 'internal scratch']
  %s0 = inlined_call_operand.vmem [shape: bf16[16,8], index: 0, kind: input, shape index: {}]
  %s1 = inlined_call_operand.vmem [shape: bf16[8,256], index: 1, kind: input, shape index: {}]
  %s2 = inlined_call_operand.hbm [shape: bf16[256,256], index: 2, kind: input, shape index: {}]
  %s3 = inlined_call_operand.hbm [shape: bf16[256,128], index: 3, kind: input, shape index: {}]
  %s4 = inlined_call_operand.vmem [shape: f32[2,256], index: 4, kind: input, shape index: {}]
  %s5 = inlined_call_operand.vmem [shape: f32[3,128], index: 5, kind: input, shape index: {}]
  %s6 = inlined_call_operand.hbm [shape: f32[16,128], index: 6, kind: output, shape index: {}]
  %s7 = sld [smem:[#allocation0]]
  $region42: #{tpu_custom_call.1} parent=0
    _
  %s9 = ssub.s32 1, %s7
  %s10 = scalar_select 0, %s9, %s7
  $region1: #{tpu_custom_call.1} parent=0
    #allocation2 [shape = 'u8[131072]{0}', space=vmem, size = 0x20000, scoped, tag = 'input window, operand 2, single buffered']
    #allocation3 [shape = 's32[1]{0}', space=sflag, size = 0x4, scoped, tag = 'scoped memory for tpu_custom_call.1']
    #allocation4 [shape = 's32[1]{0}', space=sflag, size = 0x4, scoped, tag = 'scoped memory for tpu_custom_call.1']
    #allocation5 [shape = 'u8[65536]{0}', space=vmem, size = 0x10000, scoped, tag = 'input window, operand 3, single buffered']
    #allocation6 [shape = 's32[1]{0}', space=sflag, size = 0x4, scoped, tag = 'scoped memory for tpu_custom_call.1']
    #allocation7 [shape = 'u8[8192]{0}', space=vmem, size = 0x2000, scoped, tag = 'output window, operand 0, single buffered']
    %11 = vsyncpa [#allocation3], 0
    %12 = vsyncpa [#allocation6], 0
    %13 = vsyncpa [#allocation4], 0
    // Predicated region
    $region2: #{tpu_custom_call.1} parent=1 // pred_check
      _
    $region3: #{tpu_custom_call.1} parent=1 // pred_check_branch
      %15 = sbr.rel (0) target = $region5
    $region4: #{tpu_custom_call.1} parent=1 // pred_region
      _
    $region5: #{tpu_custom_call.1} parent=1 // pred_fallthru
      _
    // Predicated region
    $region6: #{tpu_custom_call.1} parent=1 // pred_check
      _
    $region7: #{tpu_custom_call.1} parent=1 // pred_check_branch
      %17 = sbr.rel (0) target = $region9
    $region8: #{tpu_custom_call.1} parent=1 // pred_region
      _
    $region9: #{tpu_custom_call.1} parent=1 // pred_fallthru
      _
    // Predicated region
    $region10: #{tpu_custom_call.1} parent=1 // pred_check
      _
    $region11: #{tpu_custom_call.1} parent=1 // pred_check_branch
      %19 = sbr.rel (0) target = $region13
    $region12: #{tpu_custom_call.1} parent=1 // pred_region
      %s21 = ssub.s32 4096, 4096
      %22 = vsyncadd [#allocation3], %s21
      %s23 = sshll.u32 [#allocation2], 4
      %s24 = int_to_ptr.vmem [resolvable:$true] %s23
      %29 = dma.hbm_to_vmem [thread:$0]  %s2, 4096, %s24, [#allocation3], 128, 128, 8
    $region13: #{tpu_custom_call.1} parent=1 // pred_fallthru
      _
    // Predicated region
    $region14: #{tpu_custom_call.1} parent=1 // pred_check
      _
    $region15: #{tpu_custom_call.1} parent=1 // pred_check_branch
      %31 = sbr.rel (0) target = $region17
    $region16: #{tpu_custom_call.1} parent=1 // pred_region
      %s33 = ssub.s32 2048, 2048
      %34 = vsyncadd [#allocation6], %s33
      %s35 = sshll.u32 [#allocation5], 4
      %s36 = int_to_ptr.vmem [resolvable:$true] %s35
      %41 = dma.hbm_to_vmem [thread:$0]  %s3, 2048, %s36, [#allocation6], 64, 64, 4
    $region17: #{tpu_custom_call.1} parent=1 // pred_fallthru
      _
    // Predicated region
    $region18: #{tpu_custom_call.1} parent=1 // pred_check
      _
    $region19: #{tpu_custom_call.1} parent=1 // pred_check_branch
      %43 = sbr.rel (0) target = $region21
    $region20: #{tpu_custom_call.1} parent=1 // pred_region
      _
    $region21: #{tpu_custom_call.1} parent=1 // pred_fallthru
      _
    // Predicated region
    $region22: #{tpu_custom_call.1} parent=1 // pred_check
      _
    $region23: #{tpu_custom_call.1} parent=1 // pred_check_branch
      %45 = sbr.rel (0) target = $region25
    $region24: #{tpu_custom_call.1} parent=1 // pred_region
      _
    $region25: #{tpu_custom_call.1} parent=1 // pred_fallthru
      _
    // Predicated region
    $region26: #{tpu_custom_call.1} parent=1 // pred_check
      _
    $region27: #{tpu_custom_call.1} parent=1 // pred_check_branch
      %47 = sbr.rel (0) target = $region29
    $region28: #{tpu_custom_call.1} parent=1 // pred_region
      %48 = dma.done [#allocation3], 4096
    $region29: #{tpu_custom_call.1} parent=1 // pred_fallthru
      _
    // Predicated region
    $region30: #{tpu_custom_call.1} parent=1 // pred_check
      _
    $region31: #{tpu_custom_call.1} parent=1 // pred_check_branch
      %50 = sbr.rel (0) target = $region33
    $region32: #{tpu_custom_call.1} parent=1 // pred_region
      %51 = dma.done [#allocation6], 2048
    $region33: #{tpu_custom_call.1} parent=1 // pred_fallthru
      _
    %v53 = vld [vmem:[%s4] ss:$2 sm:$0x3]
    %s54 = scalar_lea.vmem %s4, 1
    %v55 = vld [vmem:[%s54] ss:$2 sm:$0x3]
    %v56 = vld [vmem:[%s5] sm:$0x1]
    %v57 = vld [vmem:[%s5 + $0x1] sm:$0x1]
    %v58 = vld [vmem:[%s5 + $0x2] sm:$0x1]
    %v59 = vld [vmem:[%s0] sm:$0xf]
    %v60 = vld [vmem:[%s0 + $0x4] sm:$0xf]
    %v61 = vld [vmem:[%s1] sm:$0xff]
    %v63 = vlaneseq
    %v64 = vshrl.u32 %v63, 7
    %v65 = vsub.s32 0, %v64
    %v66 = vrot.slane %v53, %v65
    %v67 = vlaneseq
    %v68 = vshrl.u32 %v67, 7
    %v69 = vsub.s32 1, %v68
    %v70 = vrot.slane %v53, %v69
    %v75 = vunpack.c.l.b16 %v59
    %v76 = vunpack.c.l.b16 %v60
    %v77 = vpack.c.b16 %v76, %v75
    %v79 = vunpack.c.l.b16 %v61
    %v80 = vunpack.c.h.b16 %v61
    %v81 = vpack.c.b16 %v79, %v79
    %v82 = vpack.c.b16 %v80, %v80
    %vm83 = vcmask 64512
    %v85 = vsel %vm83, %v77, 0
    %vm87 = vcmask 1043456
    %v89 = vsel %vm87, %v81, 0
    %v92 = vsel %vm87, %v82, 0
    %94 = vmatprep.subr.bf16.mxu0 %v92
    %95 = vmatpush1.bf16.msra.mxu0 %v89
    %96 = vmatprep.subr.bf16.mxu0 0
    %97 = vmatpush1.bf16.msra.mxu0 0
    %98 = vmatprep.subr.bf16.mxu0 0
    %99 = vmatpush1.bf16.msra.mxu0 0
    %100 = vmatprep.subr.bf16.mxu0 0
    %101 = vmatpush1.bf16.msra.mxu0 0
    %102 = vmatprep.subr.bf16.mxu0 0
    %103 = vmatpush1.bf16.msra.mxu0 0
    %104 = vmatprep.subr.bf16.mxu0 0
    %105 = vmatpush1.bf16.msra.mxu0 0
    %106 = vmatprep.subr.bf16.mxu0 0
    %107 = vmatpush1.bf16.msra.mxu0 0
    %108 = vmatprep.subr.bf16.mxu0 0
    %109 = vmatpush1.bf16.msra.mxu0 0
    %110 = vmatprep.subr.bf16.mxu0 0
    %111 = vmatpush1.bf16.msra.mxu0 0
    %112 = vmatprep.subr.bf16.mxu0 0
    %113 = vmatpush1.bf16.msra.mxu0 0
    %114 = vmatprep.subr.bf16.mxu0 0
    %115 = vmatpush1.bf16.msra.mxu0 0
    %116 = vmatprep.subr.bf16.mxu0 0
    %117 = vmatpush1.bf16.msra.mxu0 0
    %118 = vmatprep.subr.bf16.mxu0 0
    %119 = vmatpush1.bf16.msra.mxu0 0
    %120 = vmatprep.subr.bf16.mxu0 0
    %121 = vmatpush1.bf16.msra.mxu0 0
    %122 = vmatprep.subr.bf16.mxu0 0
    %123 = vmatpush1.bf16.msra.mxu0 0
    %124 = vmatprep.subr.bf16.mxu0 0
    %125 = vmatpush1.bf16.msra.mxu0 0
    %126 = vmatprep.mubr.bf16.mxu0 0
    %127 = vmatmul.mubr.bf16.gmra.mrb[0].mxu0 %v85
    %v128 = vpop.f32.mrb[0].mxu0
    %v129 = vadd.f32 %v66, %v128
    %v130 = vpop.f32.mrb[0].mxu0
    %v131 = vadd.f32 %v70, %v130
    %v132 = vpop.f32.mrb[0].mxu0
    %v133 = vadd.f32 %v66, %v132
    %v134 = vpop.f32.mrb[0].mxu0
    %v135 = vadd.f32 %v70, %v134
    %136 = vdwg.mxu0
    %v137 = vmax.f32 %v129, 0.0
    %v138 = vmax.f32 %v131, 0.0
    %v139 = vmax.f32 %v133, 0.0
    %v140 = vmax.f32 %v135, 0.0
    %v141 = vpack.c.bf16 %v139, %v137
    %v142 = vpack.c.bf16 %v140, %v138
    %v143 = vld [vmem:[#allocation2] sm:$0xff]
    %v144 = vld [vmem:[#allocation2 + $0x8] sm:$0xff]
    %v145 = vld [vmem:[#allocation2 + $0x10] sm:$0xff]
    %v146 = vld [vmem:[#allocation2 + $0x18] sm:$0xff]
    %v147 = vld [vmem:[#allocation2 + $0x20] sm:$0xff]
    %v148 = vld [vmem:[#allocation2 + $0x28] sm:$0xff]
    %v149 = vld [vmem:[#allocation2 + $0x30] sm:$0xff]
    %v150 = vld [vmem:[#allocation2 + $0x38] sm:$0xff]
    %v151 = vld [vmem:[#allocation2 + $0x40] sm:$0xff]
    %v152 = vld [vmem:[#allocation2 + $0x48] sm:$0xff]
    %v153 = vld [vmem:[#allocation2 + $0x50] sm:$0xff]
    %v154 = vld [vmem:[#allocation2 + $0x58] sm:$0xff]
    %v155 = vld [vmem:[#allocation2 + $0x60] sm:$0xff]
    %v156 = vld [vmem:[#allocation2 + $0x68] sm:$0xff]
    %v157 = vld [vmem:[#allocation2 + $0x70] sm:$0xff]
    %v158 = vld [vmem:[#allocation2 + $0x78] sm:$0xff]
    %v159 = vld [vmem:[#allocation2 + $0x80] sm:$0xff]
    %v160 = vld [vmem:[#allocation2 + $0x88] sm:$0xff]
    %v161 = vld [vmem:[#allocation2 + $0x90] sm:$0xff]
    %v162 = vld [vmem:[#allocation2 + $0x98] sm:$0xff]
    %v163 = vld [vmem:[#allocation2 + $0xa0] sm:$0xff]
    %v164 = vld [vmem:[#allocation2 + $0xa8] sm:$0xff]
    %v165 = vld [vmem:[#allocation2 + $0xb0] sm:$0xff]
    %v166 = vld [vmem:[#allocation2 + $0xb8] sm:$0xff]
    %v167 = vld [vmem:[#allocation2 + $0xc0] sm:$0xff]
    %v168 = vld [vmem:[#allocation2 + $0xc8] sm:$0xff]
    %v169 = vld [vmem:[#allocation2 + $0xd0] sm:$0xff]
    %v170 = vld [vmem:[#allocation2 + $0xd8] sm:$0xff]
    %v171 = vld [vmem:[#allocation2 + $0xe0] sm:$0xff]
    %v172 = vld [vmem:[#allocation2 + $0xe8] sm:$0xff]
    %v173 = vld [vmem:[#allocation2 + $0xf0] sm:$0xff]
    %v174 = vld [vmem:[#allocation2 + $0xf8] sm:$0xff]
    %v176 = vlaneseq
    %v177 = vshrl.u32 %v176, 7
    %v178 = vsub.s32 0, %v177
    %v179 = vrot.slane %v55, %v178
    %v180 = vlaneseq
    %v181 = vshrl.u32 %v180, 7
    %v182 = vsub.s32 1, %v181
    %v183 = vrot.slane %v55, %v182
    %v218 = vunpack.c.l.b16 %v143
    %v219 = vunpack.c.h.b16 %v143
    %v220 = vunpack.c.l.b16 %v144
    %v221 = vunpack.c.h.b16 %v144
    %v222 = vunpack.c.l.b16 %v145
    %v223 = vunpack.c.h.b16 %v145
    %v224 = vunpack.c.l.b16 %v146
    %v225 = vunpack.c.h.b16 %v146
    %v226 = vunpack.c.l.b16 %v147
    %v227 = vunpack.c.h.b16 %v147
    %v228 = vunpack.c.l.b16 %v148
    %v229 = vunpack.c.h.b16 %v148
    %v230 = vunpack.c.l.b16 %v149
    %v231 = vunpack.c.h.b16 %v149
    %v232 = vunpack.c.l.b16 %v150
    %v233 = vunpack.c.h.b16 %v150
    %v234 = vunpack.c.l.b16 %v151
    %v235 = vunpack.c.h.b16 %v151
    %v236 = vunpack.c.l.b16 %v152
    %v237 = vunpack.c.h.b16 %v152
    %v238 = vunpack.c.l.b16 %v153
    %v239 = vunpack.c.h.b16 %v153
    %v240 = vunpack.c.l.b16 %v154
    %v241 = vunpack.c.h.b16 %v154
    %v242 = vunpack.c.l.b16 %v155
    %v243 = vunpack.c.h.b16 %v155
    %v244 = vunpack.c.l.b16 %v156
    %v245 = vunpack.c.h.b16 %v156
    %v246 = vunpack.c.l.b16 %v157
    %v247 = vunpack.c.h.b16 %v157
    %v248 = vunpack.c.l.b16 %v158
    %v249 = vunpack.c.h.b16 %v158
    %v250 = vunpack.c.l.b16 %v159
    %v251 = vunpack.c.h.b16 %v159
    %v252 = vunpack.c.l.b16 %v160
    %v253 = vunpack.c.h.b16 %v160
    %v254 = vunpack.c.l.b16 %v161
    %v255 = vunpack.c.h.b16 %v161
    %v256 = vunpack.c.l.b16 %v162
    %v257 = vunpack.c.h.b16 %v162
    %v258 = vunpack.c.l.b16 %v163
    %v259 = vunpack.c.h.b16 %v163
    %v260 = vunpack.c.l.b16 %v164
    %v261 = vunpack.c.h.b16 %v164
    %v262 = vunpack.c.l.b16 %v165
    %v263 = vunpack.c.h.b16 %v165
    %v264 = vunpack.c.l.b16 %v166
    %v265 = vunpack.c.h.b16 %v166
    %v266 = vunpack.c.l.b16 %v167
    %v267 = vunpack.c.h.b16 %v167
    %v268 = vunpack.c.l.b16 %v168
    %v269 = vunpack.c.h.b16 %v168
    %v270 = vunpack.c.l.b16 %v169
    %v271 = vunpack.c.h.b16 %v169
    %v272 = vunpack.c.l.b16 %v170
    %v273 = vunpack.c.h.b16 %v170
    %v274 = vunpack.c.l.b16 %v171
    %v275 = vunpack.c.h.b16 %v171
    %v276 = vunpack.c.l.b16 %v172
    %v277 = vunpack.c.h.b16 %v172
    %v278 = vunpack.c.l.b16 %v173
    %v279 = vunpack.c.h.b16 %v173
    %v280 = vunpack.c.l.b16 %v174
    %v281 = vunpack.c.h.b16 %v174
    %v282 = vpack.c.b16 %v220, %v218
    %v283 = vpack.c.b16 %v221, %v219
    %v284 = vpack.c.b16 %v224, %v222
    %v285 = vpack.c.b16 %v225, %v223
    %v286 = vpack.c.b16 %v228, %v226
    %v287 = vpack.c.b16 %v229, %v227
    %v288 = vpack.c.b16 %v232, %v230
    %v289 = vpack.c.b16 %v233, %v231
    %v290 = vpack.c.b16 %v236, %v234
    %v291 = vpack.c.b16 %v237, %v235
    %v292 = vpack.c.b16 %v240, %v238
    %v293 = vpack.c.b16 %v241, %v239
    %v294 = vpack.c.b16 %v244, %v242
    %v295 = vpack.c.b16 %v245, %v243
    %v296 = vpack.c.b16 %v248, %v246
    %v297 = vpack.c.b16 %v249, %v247
    %v298 = vpack.c.b16 %v252, %v250
    %v299 = vpack.c.b16 %v253, %v251
    %v300 = vpack.c.b16 %v256, %v254
    %v301 = vpack.c.b16 %v257, %v255
    %v302 = vpack.c.b16 %v260, %v258
    %v303 = vpack.c.b16 %v261, %v259
    %v304 = vpack.c.b16 %v264, %v262
    %v305 = vpack.c.b16 %v265, %v263
    %v306 = vpack.c.b16 %v268, %v266
    %v307 = vpack.c.b16 %v269, %v267
    %v308 = vpack.c.b16 %v272, %v270
    %v309 = vpack.c.b16 %v273, %v271
    %v310 = vpack.c.b16 %v276, %v274
    %v311 = vpack.c.b16 %v277, %v275
    %v312 = vpack.c.b16 %v280, %v278
    %v313 = vpack.c.b16 %v281, %v279
    %346 = vmatprep.subr.bf16.mxu0 %v283
    %347 = vmatpush1.bf16.msra.mxu0 %v282
    %348 = vmatprep.subr.bf16.mxu0 %v285
    %349 = vmatpush1.bf16.msra.mxu0 %v284
    %350 = vmatprep.subr.bf16.mxu0 %v287
    %351 = vmatpush1.bf16.msra.mxu0 %v286
    %352 = vmatprep.subr.bf16.mxu0 %v289
    %353 = vmatpush1.bf16.msra.mxu0 %v288
    %354 = vmatprep.subr.bf16.mxu0 %v291
    %355 = vmatpush1.bf16.msra.mxu0 %v290
    %356 = vmatprep.subr.bf16.mxu0 %v293
    %357 = vmatpush1.bf16.msra.mxu0 %v292
    %358 = vmatprep.subr.bf16.mxu0 %v295
    %359 = vmatpush1.bf16.msra.mxu0 %v294
    %360 = vmatprep.subr.bf16.mxu0 %v297
    %361 = vmatpush1.bf16.msra.mxu0 %v296
    %362 = vmatprep.subr.bf16.mxu0 %v299
    %363 = vmatpush1.bf16.msra.mxu0 %v298
    %364 = vmatprep.subr.bf16.mxu0 %v301
    %365 = vmatpush1.bf16.msra.mxu0 %v300
    %366 = vmatprep.subr.bf16.mxu0 %v303
    %367 = vmatpush1.bf16.msra.mxu0 %v302
    %368 = vmatprep.subr.bf16.mxu0 %v305
    %369 = vmatpush1.bf16.msra.mxu0 %v304
    %370 = vmatprep.subr.bf16.mxu0 %v307
    %371 = vmatpush1.bf16.msra.mxu0 %v306
    %372 = vmatprep.subr.bf16.mxu0 %v309
    %373 = vmatpush1.bf16.msra.mxu0 %v308
    %374 = vmatprep.subr.bf16.mxu0 %v311
    %375 = vmatpush1.bf16.msra.mxu0 %v310
    %376 = vmatprep.subr.bf16.mxu0 %v313
    %377 = vmatpush1.bf16.msra.mxu0 %v312
    %378 = vmatprep.mubr.bf16.mxu0 %v142
    %379 = vmatmul.mubr.bf16.gmra.mrb[0].mxu0 %v141
    %v380 = vpop.f32.mrb[0].mxu0
    %v381 = vadd.f32 %v179, %v380
    %v382 = vpop.f32.mrb[0].mxu0
    %v383 = vadd.f32 %v183, %v382
    %v384 = vpop.f32.mrb[0].mxu0
    %v385 = vadd.f32 %v179, %v384
    %v386 = vpop.f32.mrb[0].mxu0
    %v387 = vadd.f32 %v183, %v386
    %388 = vdwg.mxu0
    %v389 = vmax.f32 %v381, 0.0
    %v390 = vmax.f32 %v383, 0.0
    %v391 = vmax.f32 %v385, 0.0
    %v392 = vmax.f32 %v387, 0.0
    %v393 = vpack.c.bf16 %v391, %v389
    %v394 = vpack.c.bf16 %v392, %v390
    %v395 = vld [vmem:[#allocation5] sm:$0xf]
    %v396 = vld [vmem:[#allocation5 + $0x4] sm:$0xf]
    %v397 = vld [vmem:[#allocation5 + $0x8] sm:$0xf]
    %v398 = vld [vmem:[#allocation5 + $0xc] sm:$0xf]
    %v399 = vld [vmem:[#allocation5 + $0x10] sm:$0xf]
    %v400 = vld [vmem:[#allocation5 + $0x14] sm:$0xf]
    %v401 = vld [vmem:[#allocation5 + $0x18] sm:$0xf]
    %v402 = vld [vmem:[#allocation5 + $0x1c] sm:$0xf]
    %v403 = vld [vmem:[#allocation5 + $0x20] sm:$0xf]
    %v404 = vld [vmem:[#allocation5 + $0x24] sm:$0xf]
    %v405 = vld [vmem:[#allocation5 + $0x28] sm:$0xf]
    %v406 = vld [vmem:[#allocation5 + $0x2c] sm:$0xf]
    %v407 = vld [vmem:[#allocation5 + $0x30] sm:$0xf]
    %v408 = vld [vmem:[#allocation5 + $0x34] sm:$0xf]
    %v409 = vld [vmem:[#allocation5 + $0x38] sm:$0xf]
    %v410 = vld [vmem:[#allocation5 + $0x3c] sm:$0xf]
    %v411 = vld [vmem:[#allocation5 + $0x40] sm:$0xf]
    %v412 = vld [vmem:[#allocation5 + $0x44] sm:$0xf]
    %v413 = vld [vmem:[#allocation5 + $0x48] sm:$0xf]
    %v414 = vld [vmem:[#allocation5 + $0x4c] sm:$0xf]
    %v415 = vld [vmem:[#allocation5 + $0x50] sm:$0xf]
    %v416 = vld [vmem:[#allocation5 + $0x54] sm:$0xf]
    %v417 = vld [vmem:[#allocation5 + $0x58] sm:$0xf]
    %v418 = vld [vmem:[#allocation5 + $0x5c] sm:$0xf]
    %v419 = vld [vmem:[#allocation5 + $0x60] sm:$0xf]
    %v420 = vld [vmem:[#allocation5 + $0x64] sm:$0xf]
    %v421 = vld [vmem:[#allocation5 + $0x68] sm:$0xf]
    %v422 = vld [vmem:[#allocation5 + $0x6c] sm:$0xf]
    %v423 = vld [vmem:[#allocation5 + $0x70] sm:$0xf]
    %v424 = vld [vmem:[#allocation5 + $0x74] sm:$0xf]
    %v425 = vld [vmem:[#allocation5 + $0x78] sm:$0xf]
    %v426 = vld [vmem:[#allocation5 + $0x7c] sm:$0xf]
    %v427 = vlaneseq
    %v428 = vshrl.u32 %v427, 7
    %v429 = vsub.s32 0, %v428
    %v430 = vrot.slane %v56, %v429
    %v463 = vunpack.c.l.b16 %v395
    %v464 = vunpack.c.l.b16 %v396
    %v465 = vunpack.c.l.b16 %v397
    %v466 = vunpack.c.l.b16 %v398
    %v467 = vunpack.c.l.b16 %v399
    %v468 = vunpack.c.l.b16 %v400
    %v469 = vunpack.c.l.b16 %v401
    %v470 = vunpack.c.l.b16 %v402
    %v471 = vunpack.c.l.b16 %v403
    %v472 = vunpack.c.l.b16 %v404
    %v473 = vunpack.c.l.b16 %v405
    %v474 = vunpack.c.l.b16 %v406
    %v475 = vunpack.c.l.b16 %v407
    %v476 = vunpack.c.l.b16 %v408
    %v477 = vunpack.c.l.b16 %v409
    %v478 = vunpack.c.l.b16 %v410
    %v479 = vunpack.c.l.b16 %v411
    %v480 = vunpack.c.l.b16 %v412
    %v481 = vunpack.c.l.b16 %v413
    %v482 = vunpack.c.l.b16 %v414
    %v483 = vunpack.c.l.b16 %v415
    %v484 = vunpack.c.l.b16 %v416
    %v485 = vunpack.c.l.b16 %v417
    %v486 = vunpack.c.l.b16 %v418
    %v487 = vunpack.c.l.b16 %v419
    %v488 = vunpack.c.l.b16 %v420
    %v489 = vunpack.c.l.b16 %v421
    %v490 = vunpack.c.l.b16 %v422
    %v491 = vunpack.c.l.b16 %v423
    %v492 = vunpack.c.l.b16 %v424
    %v493 = vunpack.c.l.b16 %v425
    %v494 = vunpack.c.l.b16 %v426
    %v495 = vpack.c.b16 %v464, %v463
    %v496 = vpack.c.b16 %v466, %v465
    %v497 = vpack.c.b16 %v468, %v467
    %v498 = vpack.c.b16 %v470, %v469
    %v499 = vpack.c.b16 %v472, %v471
    %v500 = vpack.c.b16 %v474, %v473
    %v501 = vpack.c.b16 %v476, %v475
    %v502 = vpack.c.b16 %v478, %v477
    %v503 = vpack.c.b16 %v480, %v479
    %v504 = vpack.c.b16 %v482, %v481
    %v505 = vpack.c.b16 %v484, %v483
    %v506 = vpack.c.b16 %v486, %v485
    %v507 = vpack.c.b16 %v488, %v487
    %v508 = vpack.c.b16 %v490, %v489
    %v509 = vpack.c.b16 %v492, %v491
    %v510 = vpack.c.b16 %v494, %v493
    %527 = vmatprep.subr.bf16.mxu0 0
    %528 = vmatpush1.bf16.msra.mxu0 %v495
    %529 = vmatprep.subr.bf16.mxu0 0
    %530 = vmatpush1.bf16.msra.mxu0 %v496
    %531 = vmatprep.subr.bf16.mxu0 0
    %532 = vmatpush1.bf16.msra.mxu0 %v497
    %533 = vmatprep.subr.bf16.mxu0 0
    %534 = vmatpush1.bf16.msra.mxu0 %v498
    %535 = vmatprep.subr.bf16.mxu0 0
    %536 = vmatpush1.bf16.msra.mxu0 %v499
    %537 = vmatprep.subr.bf16.mxu0 0
    %538 = vmatpush1.bf16.msra.mxu0 %v500
    %539 = vmatprep.subr.bf16.mxu0 0
    %540 = vmatpush1.bf16.msra.mxu0 %v501
    %541 = vmatprep.subr.bf16.mxu0 0
    %542 = vmatpush1.bf16.msra.mxu0 %v502
    %543 = vmatprep.subr.bf16.mxu0 0
    %544 = vmatpush1.bf16.msra.mxu0 %v503
    %545 = vmatprep.subr.bf16.mxu0 0
    %546 = vmatpush1.bf16.msra.mxu0 %v504
    %547 = vmatprep.subr.bf16.mxu0 0
    %548 = vmatpush1.bf16.msra.mxu0 %v505
    %549 = vmatprep.subr.bf16.mxu0 0
    %550 = vmatpush1.bf16.msra.mxu0 %v506
    %551 = vmatprep.subr.bf16.mxu0 0
    %552 = vmatpush1.bf16.msra.mxu0 %v507
    %553 = vmatprep.subr.bf16.mxu0 0
    %554 = vmatpush1.bf16.msra.mxu0 %v508
    %555 = vmatprep.subr.bf16.mxu0 0
    %556 = vmatpush1.bf16.msra.mxu0 %v509
    %557 = vmatprep.subr.bf16.mxu0 0
    %558 = vmatpush1.bf16.msra.mxu0 %v510
    %559 = vmatprep.mubr.bf16.mxu0 %v394
    %560 = vmatmul.mubr.bf16.gmra.mrb[0].mxu0 %v393
    %v561 = vpop.f32.mrb[0].mxu0
    %v562 = vadd.f32 %v430, %v561
    %v563 = vpop.f32.mrb[0].mxu0
    %v564 = vpop.f32.mrb[0].mxu0
    %v565 = vadd.f32 %v430, %v564
    %v566 = vpop.f32.mrb[0].mxu0
    %567 = vdwg.mxu0
    %v568 = vtanh.pop %v562
    %v569 = vtanh.pop %v565
    %v570 = vlaneseq
    %v571 = vshrl.u32 %v570, 7
    %v572 = vsub.s32 0, %v571
    %v573 = vrot.slane %v57, %v572
    %v574 = vmul.f32 %v568, %v573
    %v575 = vmul.f32 %v569, %v573
    %v576 = vlaneseq
    %v577 = vshrl.u32 %v576, 7
    %v578 = vsub.s32 0, %v577
    %v579 = vrot.slane %v58, %v578
    %v580 = vadd.f32 %v574, %v579
    %v581 = vadd.f32 %v575, %v579
    %582 = vst [vmem:[#allocation7] sm:$0xff] %v580
    %583 = vst [vmem:[#allocation7 + $0x8] sm:$0xff] %v581
    // Predicated region
    $region34: #{tpu_custom_call.1} parent=1 // pred_check
      _
    $region35: #{tpu_custom_call.1} parent=1 // pred_check_branch
      %585 = sbr.rel (0) target = $region37
    $region36: #{tpu_custom_call.1} parent=1 // pred_region
      %s587 = ssub.s32 256, 256
      %588 = vsyncadd [#allocation4], %s587
      %s589 = sshll.u32 [#allocation7], 4
      %s590 = int_to_ptr.vmem [resolvable:$true] %s589
      %595 = dma.vmem_to_hbm [thread:$0]  %s590, 256, %s6, [#allocation4], 128, 128, 8
    $region37: #{tpu_custom_call.1} parent=1 // pred_fallthru
      _
    // Predicated region
    $region38: #{tpu_custom_call.1} parent=1 // pred_check
      _
    $region39: #{tpu_custom_call.1} parent=1 // pred_check_branch
      %597 = sbr.rel (0) target = $region41
    $region40: #{tpu_custom_call.1} parent=1 // pred_region
      %598 = dma.done [#allocation4], 256
    $region41: #{tpu_custom_call.1} parent=1 // pred_fallthru
      _
    %599 = vsyncpa [#allocation3], 1
    %600 = vsyncpa [#allocation6], 1
    %601 = vsyncpa [#allocation4], 1

</llo_original>
